<compile_context>
chip_gen: v6e
topology: v6e:2x2x1
jax: 0.10.0
libtpu: 0.0.40
codegen_flags: <defaults>
</compile_context>

<pallas_src>
import functools

import jax
import jax.numpy as jnp
from jax import lax
from jax.experimental import pallas as pl
from jax.experimental.pallas import tpu as pltpu

OUT_PAD = 128  # lane-dense padded width of the fused head output


def _round_up(x, m):
    return ((x + m - 1) // m) * m


def _default_act_dtype():
    """bf16 transcendentals on chips with a bf16 VPU/EUP (v6e/v7x); f32 otherwise."""
    try:
        kind = jax.devices()[0].device_kind.lower()
    except Exception:
        return jnp.float32
    for old in ("v2", "v3", "v4", "v5"):
        if old in kind:
            return jnp.float32
    return jnp.bfloat16


def _mlp_kernel(x_ref,
                w_in_ref, b_in_ref,
                w_h1_ref, b_h1_ref,
                w_h2_ref, b_h2_ref,
                w_h3_ref, b_h3_ref,
                w_head_a_ref, w_head_b_ref, b_head_ref,
                out_ref,
                *, out_dim1, act_dtype):
    bf16 = jnp.bfloat16
    f32 = jnp.float32

    # Fold the f32 -> bf16 cast of x into the kernel (x arrives as f32).
    x = x_ref[...].astype(bf16)

    def sig(pre_f32):
        # Transcendental in act_dtype (bf16 on v6e/v7x, f32 on v5e); result is
        # bf16 since it only feeds the next bf16 MXU matmul.
        return jax.nn.sigmoid(pre_f32.astype(act_dtype)).astype(bf16)

    # l_1 = input(parameters)          (no activation)
    l_1 = (jnp.dot(x, w_in_ref[...], preferred_element_type=f32)
           + b_in_ref[...]).astype(bf16)

    # l_2 = sigmoid(hidden1(l_1)); l_3 = sigmoid(hidden2(l_2)); l_4 = sigmoid(hidden3(l_3))
    l_2 = sig(jnp.dot(l_1, w_h1_ref[...], preferred_element_type=f32) + b_h1_ref[...])
    l_3 = sig(jnp.dot(l_2, w_h2_ref[...], preferred_element_type=f32) + b_h2_ref[...])
    l_4 = sig(jnp.dot(l_3, w_h3_ref[...], preferred_element_type=f32) + b_h3_ref[...])

    # Fused head: output(l_4) and hyp(l_3) as two K=128 GEMMs into ONE
    # lane-dense (tm, 128) logit tile (no (tm, 256) concat relayout).
    logits = (jnp.dot(l_4, w_head_a_ref[...], preferred_element_type=f32)
              + jnp.dot(l_3, w_head_b_ref[...], preferred_element_type=f32)
              + b_head_ref[...])

    cols = lax.broadcasted_iota(jnp.int32, logits.shape, 1)
    w_mask = cols < out_dim1

    # w_pred = softmax(output(l_4), dim=1)  ('vanilla'), over the first out_dim1
    # lanes.  Padded lanes are driven to -inf so exp() yields exact zeros (keep
    # the where as a true select; do not turn it into multiply-by-mask).
    m = jnp.max(jnp.where(w_mask, logits, -jnp.inf), axis=-1, keepdims=True)
    shifted = jnp.where(w_mask, logits - m, -jnp.inf)
    e = jnp.exp(shifted.astype(act_dtype)).astype(f32)
    denom = jnp.sum(e, axis=-1, keepdims=True)
    inv = 1.0 / denom                      # EXACT normalization: rows sum to 1
    w_pred = e * inv

    # hyp = sigmoid(hyp(l_3)) * 5 + 1   (lives at lane index == out_dim1)
    hyp = jax.nn.sigmoid(logits.astype(act_dtype)).astype(f32) * 5.0 + 1.0

    out_ref[...] = jnp.where(
        w_mask, w_pred,
        jnp.where(cols == out_dim1, hyp, 0.0)).astype(out_ref.dtype)


def pack_kernel_params(params, out_dim1):
    """Kernel-ready weights: bf16 MXU weights, f32 biases, split fused head."""
    assert out_dim1 + 1 <= OUT_PAD
    f32, bf16 = jnp.float32, jnp.bfloat16

    # Head split: w_head_a multiplies l_4 (-> output cols 0:out_dim1),
    # w_head_b multiplies l_3 (-> hyp logit at lane out_dim1).  Padded lanes
    # are zero so their logits are exactly 0.
    w_head_a = jnp.zeros((128, OUT_PAD), f32).at[:, :out_dim1].set(params["w_out"])
    w_head_b = jnp.zeros((128, OUT_PAD), f32).at[:, out_dim1].set(params["w_hyp"][:, 0])
    b_head = jnp.zeros((1, OUT_PAD), f32)
    b_head = b_head.at[:, :out_dim1].set(params["b_out"])
    b_head = b_head.at[:, out_dim1].set(params["b_hyp"][0, 0])

    return (
        params["w_in"].astype(bf16), params["b_in"].astype(f32),
        params["w_h1"].astype(bf16), params["b_h1"].astype(f32),
        params["w_h2"].astype(bf16), params["b_h2"].astype(f32),
        params["w_h3"].astype(bf16), params["b_h3"].astype(f32),
        w_head_a.astype(bf16), w_head_b.astype(bf16), b_head.astype(f32),
    )


def my_mlp1_forward(x, packed_params, *, out_dim1, tm=2048, act_dtype=None):
    """x: (B, input_dim) f32.  packed_params: output of pack_kernel_params.

    Returns (w_pred (B, out_dim1) f32, hyp (B, 1) f32).
    """
    B, input_dim = x.shape
    if act_dtype is None:
        act_dtype = _default_act_dtype()

    # Batch tiling.  tm=2048 keeps the per-step footprint (~10 MiB of f32
    # intermediates + <1 MiB of tiles/weights) well inside the 32 MiB scoped
    # VMEM limit, which is also safe on v7x (64 MiB physical).
    tm = min(tm, _round_up(B, 8))
    # v7x megacore: guarantee >= 2 grid steps whenever the batch allows, so the
    # "parallel" batch axis can actually be sharded across both TensorCores.
    if B > 8 and _round_up(B, tm) // tm < 2:
        tm = max(8, _round_up(pl.cdiv(B, 2), 8))
    b_pad = _round_up(B, tm)
    if b_pad != B:
        x = jnp.pad(x, ((0, b_pad - B), (0, 0)))
    # NOTE: x stays f32 here; the bf16 cast happens inside the kernel.

    def const_spec(arr):
        # Constant index_map => weights stay VMEM-resident across grid steps.
        return pl.BlockSpec(arr.shape, lambda i: (0, 0))

    in_specs = [pl.BlockSpec((tm, input_dim), lambda i: (i, 0))]
    in_specs += [const_spec(p) for p in packed_params]

    out = pl.pallas_call(
        functools.partial(_mlp_kernel, out_dim1=out_dim1, act_dtype=act_dtype),
        # bf16 writeback halves the dominant HBM term (128 lanes/row).
        out_shape=jax.ShapeDtypeStruct((b_pad, OUT_PAD), jnp.bfloat16),
        grid=(b_pad // tm,),
        in_specs=in_specs,
        out_specs=pl.BlockSpec((tm, OUT_PAD), lambda i: (i, 0)),
        compiler_params=pltpu.CompilerParams(
            dimension_semantics=("parallel",),
            vmem_limit_bytes=32 * 1024 * 1024,
        ),
    )(x, *packed_params)

    w_pred = out[:B, :out_dim1].astype(jnp.float32)
    hyp = out[:B, out_dim1:out_dim1 + 1].astype(jnp.float32)
    return w_pred, hyp


def init_params(key, input_dim, output_dim1):
    """Deterministic init. PyTorch Linear weight is (out, in); we store (in, out)."""
    dims = [
        ("in", input_dim, 256),
        ("h1", 256, 256),
        ("h2", 256, 128),
        ("h3", 128, 128),
        ("out", 128, output_dim1),
        ("hyp", 128, 1),
    ]
    params = {}
    for name, fan_in, fan_out in dims:
        key, kw, kb = jax.random.split(key, 3)
        bound = 1.0 / jnp.sqrt(fan_in)
        params[f"w_{name}"] = jax.random.uniform(
            kw, (fan_in, fan_out), jnp.float32, -bound, bound)
        params[f"b_{name}"] = jax.random.uniform(
            kb, (1, fan_out), jnp.float32, -bound, bound)
    return params


def reference_forward(x, params):
    """Pure-JAX f32 reference matching my_MLP1.forward (softmax_type='vanilla')."""
    l_1 = x @ params["w_in"] + params["b_in"]
    l_2 = jax.nn.sigmoid(l_1 @ params["w_h1"] + params["b_h1"])
    l_3 = jax.nn.sigmoid(l_2 @ params["w_h2"] + params["b_h2"])
    l_4 = jax.nn.sigmoid(l_3 @ params["w_h3"] + params["b_h3"])
    w_pred = jax.nn.softmax(l_4 @ params["w_out"] + params["b_out"], axis=1)
    hyp = jax.nn.sigmoid(l_3 @ params["w_hyp"] + params["b_hyp"]) * 5.0 + 1.0
    return w_pred, hyp


if __name__ == "__main__":
    batch = 8
    input_dim = 32
    output_dim1 = 8

    key = jax.random.PRNGKey(0)
    key, kx = jax.random.split(key)
    x = jax.random.normal(kx, (batch, input_dim), jnp.float32)
    params = init_params(key, input_dim, output_dim1)
    packed = pack_kernel_params(params, output_dim1)

    w_pred, hyp = my_mlp1_forward(x, packed, out_dim1=output_dim1)
    jax.block_until_ready((w_pred, hyp))

    w_ref, h_ref = reference_forward(x, params)
    assert w_pred.shape == (batch, output_dim1) and hyp.shape == (batch, 1)
    # bf16 MXU operands / bf16 transcendentals / bf16 output storage: compare
    # against the f32 reference at a bf16-appropriate tolerance.
    assert jnp.allclose(w_pred, w_ref, atol=5e-2, rtol=5e-2)
    assert jnp.allclose(hyp, h_ref, atol=5e-2, rtol=5e-2)
    # Normalization is exact in-kernel (f32 divide); the only residual row-sum
    # error is the bf16 rounding of the stored probabilities (~3e-4 typical).
    assert jnp.allclose(jnp.sum(w_pred, axis=1), 1.0, atol=5e-3)

    print("KERNEL_OK")
</pallas_src>

<mosaic_0001>
module attributes {stable_mosaic.version = 11 : i64} {
  func.func @_mlp_kernel(%arg0: i32, %arg1: memref<8x32xf32, #tpu.memory_space<vmem>>, %arg2: memref<32x256xbf16, #tpu.memory_space<vmem>>, %arg3: memref<1x256xf32, #tpu.memory_space<vmem>>, %arg4: memref<256x256xbf16, #tpu.memory_space<vmem>>, %arg5: memref<1x256xf32, #tpu.memory_space<vmem>>, %arg6: memref<256x128xbf16, #tpu.memory_space<vmem>>, %arg7: memref<1x128xf32, #tpu.memory_space<vmem>>, %arg8: memref<128x128xbf16, #tpu.memory_space<vmem>>, %arg9: memref<1x128xf32, #tpu.memory_space<vmem>>, %arg10: memref<128x128xbf16, #tpu.memory_space<vmem>>, %arg11: memref<128x128xbf16, #tpu.memory_space<vmem>>, %arg12: memref<1x128xf32, #tpu.memory_space<vmem>>, %arg13: memref<8x128xbf16, #tpu.memory_space<vmem>>) attributes {dimension_semantics = [#tpu.dimension_semantics<parallel>], iteration_bounds = array<i64: 1>, scalar_prefetch = 0 : i64, scratch_operands = 0 : i64, tpu.core_type = #tpu.core_type<tc>, window_params = [{transform_indices = @transform_0, window_bounds = array<i64: 8, 32>}, {pipeline_mode = #tpu.pipeline_mode<synchronous>, transform_indices = @transform_1, window_bounds = array<i64: 32, 256>}, {pipeline_mode = #tpu.pipeline_mode<synchronous>, transform_indices = @transform_2, window_bounds = array<i64: 1, 256>}, {pipeline_mode = #tpu.pipeline_mode<synchronous>, transform_indices = @transform_3, window_bounds = array<i64: 256, 256>}, {pipeline_mode = #tpu.pipeline_mode<synchronous>, transform_indices = @transform_4, window_bounds = array<i64: 1, 256>}, {pipeline_mode = #tpu.pipeline_mode<synchronous>, transform_indices = @transform_5, window_bounds = array<i64: 256, 128>}, {pipeline_mode = #tpu.pipeline_mode<synchronous>, transform_indices = @transform_6, window_bounds = array<i64: 1, 128>}, {pipeline_mode = #tpu.pipeline_mode<synchronous>, transform_indices = @transform_7, window_bounds = array<i64: 128, 128>}, {pipeline_mode = #tpu.pipeline_mode<synchronous>, transform_indices = @transform_8, window_bounds = array<i64: 1, 128>}, {pipeline_mode = #tpu.pipeline_mode<synchronous>, transform_indices = @transform_9, window_bounds = array<i64: 128, 128>}, {pipeline_mode = #tpu.pipeline_mode<synchronous>, transform_indices = @transform_10, window_bounds = array<i64: 128, 128>}, {pipeline_mode = #tpu.pipeline_mode<synchronous>, transform_indices = @transform_11, window_bounds = array<i64: 1, 128>}, {transform_indices = @transform_12, window_bounds = array<i64: 8, 128>}]} {
    %c0 = arith.constant 0 : index
    %c0_0 = arith.constant 0 : index
    %0 = vector.load %arg1[%c0, %c0_0] : memref<8x32xf32, #tpu.memory_space<vmem>>, vector<8x32xf32>
    %1 = arith.truncf %0 : vector<8x32xf32> to vector<8x32xbf16>
    %c0_1 = arith.constant 0 : index
    %c0_2 = arith.constant 0 : index
    %2 = vector.load %arg2[%c0_1, %c0_2] : memref<32x256xbf16, #tpu.memory_space<vmem>>, vector<32x256xbf16>
    %cst = arith.constant dense<0.000000e+00> : vector<8x256xf32>
    %3 = tpu.matmul %1, %2, %cst {dimension_numbers = #tpu.dot_dimension_numbers<[1], [0], [0], [1], [0, 0, 1, 1], [], []>} : vector<8x32xbf16>, vector<32x256xbf16>, vector<8x256xf32> -> vector<8x256xf32>
    %c0_3 = arith.constant 0 : index
    %c0_4 = arith.constant 0 : index
    %4 = vector.load %arg3[%c0_3, %c0_4] : memref<1x256xf32, #tpu.memory_space<vmem>>, vector<1x256xf32>
    %5 = vector.broadcast %4 : vector<1x256xf32> to vector<8x256xf32>
    %6 = arith.addf %3, %5 : vector<8x256xf32>
    %7 = arith.truncf %6 : vector<8x256xf32> to vector<8x256xbf16>
    %c0_5 = arith.constant 0 : index
    %c0_6 = arith.constant 0 : index
    %8 = vector.load %arg4[%c0_5, %c0_6] : memref<256x256xbf16, #tpu.memory_space<vmem>>, vector<256x256xbf16>
    %cst_7 = arith.constant dense<0.000000e+00> : vector<8x256xf32>
    %9 = tpu.matmul %7, %8, %cst_7 {dimension_numbers = #tpu.dot_dimension_numbers<[1], [0], [0], [1], [0, 0, 1, 1], [], []>} : vector<8x256xbf16>, vector<256x256xbf16>, vector<8x256xf32> -> vector<8x256xf32>
    %c0_8 = arith.constant 0 : index
    %c0_9 = arith.constant 0 : index
    %10 = vector.load %arg5[%c0_8, %c0_9] : memref<1x256xf32, #tpu.memory_space<vmem>>, vector<1x256xf32>
    %11 = vector.broadcast %10 : vector<1x256xf32> to vector<8x256xf32>
    %12 = arith.addf %9, %11 : vector<8x256xf32>
    %13 = arith.truncf %12 : vector<8x256xf32> to vector<8x256xbf16>
    %14 = arith.negf %13 : vector<8x256xbf16>
    %15 = math.exp %14 : vector<8x256xbf16>
    %cst_10 = arith.constant 1.000000e+00 : bf16
    %16 = vector.broadcast %cst_10 : bf16 to vector<8x256xbf16>
    %17 = arith.addf %16, %15 : vector<8x256xbf16>
    %18 = arith.divf %16, %17 : vector<8x256xbf16>
    %c0_11 = arith.constant 0 : index
    %c0_12 = arith.constant 0 : index
    %19 = vector.load %arg6[%c0_11, %c0_12] : memref<256x128xbf16, #tpu.memory_space<vmem>>, vector<256x128xbf16>
    %cst_13 = arith.constant dense<0.000000e+00> : vector<8x128xf32>
    %20 = tpu.matmul %18, %19, %cst_13 {dimension_numbers = #tpu.dot_dimension_numbers<[1], [0], [0], [1], [0, 0, 1, 1], [], []>} : vector<8x256xbf16>, vector<256x128xbf16>, vector<8x128xf32> -> vector<8x128xf32>
    %c0_14 = arith.constant 0 : index
    %c0_15 = arith.constant 0 : index
    %21 = vector.load %arg7[%c0_14, %c0_15] : memref<1x128xf32, #tpu.memory_space<vmem>>, vector<1x128xf32>
    %22 = vector.broadcast %21 : vector<1x128xf32> to vector<8x128xf32>
    %23 = arith.addf %20, %22 : vector<8x128xf32>
    %24 = arith.truncf %23 : vector<8x128xf32> to vector<8x128xbf16>
    %25 = arith.negf %24 : vector<8x128xbf16>
    %26 = math.exp %25 : vector<8x128xbf16>
    %cst_16 = arith.constant 1.000000e+00 : bf16
    %27 = vector.broadcast %cst_16 : bf16 to vector<8x128xbf16>
    %28 = arith.addf %27, %26 : vector<8x128xbf16>
    %29 = arith.divf %27, %28 : vector<8x128xbf16>
    %c0_17 = arith.constant 0 : index
    %c0_18 = arith.constant 0 : index
    %30 = vector.load %arg8[%c0_17, %c0_18] : memref<128x128xbf16, #tpu.memory_space<vmem>>, vector<128x128xbf16>
    %cst_19 = arith.constant dense<0.000000e+00> : vector<8x128xf32>
    %31 = tpu.matmul %29, %30, %cst_19 {dimension_numbers = #tpu.dot_dimension_numbers<[1], [0], [0], [1], [0, 0, 1, 1], [], []>} : vector<8x128xbf16>, vector<128x128xbf16>, vector<8x128xf32> -> vector<8x128xf32>
    %c0_20 = arith.constant 0 : index
    %c0_21 = arith.constant 0 : index
    %32 = vector.load %arg9[%c0_20, %c0_21] : memref<1x128xf32, #tpu.memory_space<vmem>>, vector<1x128xf32>
    %33 = vector.broadcast %32 : vector<1x128xf32> to vector<8x128xf32>
    %34 = arith.addf %31, %33 : vector<8x128xf32>
    %35 = arith.truncf %34 : vector<8x128xf32> to vector<8x128xbf16>
    %36 = arith.negf %35 : vector<8x128xbf16>
    %37 = math.exp %36 : vector<8x128xbf16>
    %cst_22 = arith.constant 1.000000e+00 : bf16
    %38 = vector.broadcast %cst_22 : bf16 to vector<8x128xbf16>
    %39 = arith.addf %38, %37 : vector<8x128xbf16>
    %40 = arith.divf %38, %39 : vector<8x128xbf16>
    %c0_23 = arith.constant 0 : index
    %c0_24 = arith.constant 0 : index
    %41 = vector.load %arg10[%c0_23, %c0_24] : memref<128x128xbf16, #tpu.memory_space<vmem>>, vector<128x128xbf16>
    %cst_25 = arith.constant dense<0.000000e+00> : vector<8x128xf32>
    %42 = tpu.matmul %40, %41, %cst_25 {dimension_numbers = #tpu.dot_dimension_numbers<[1], [0], [0], [1], [0, 0, 1, 1], [], []>} : vector<8x128xbf16>, vector<128x128xbf16>, vector<8x128xf32> -> vector<8x128xf32>
    %c0_26 = arith.constant 0 : index
    %c0_27 = arith.constant 0 : index
    %43 = vector.load %arg11[%c0_26, %c0_27] : memref<128x128xbf16, #tpu.memory_space<vmem>>, vector<128x128xbf16>
    %cst_28 = arith.constant dense<0.000000e+00> : vector<8x128xf32>
    %44 = tpu.matmul %29, %43, %cst_28 {dimension_numbers = #tpu.dot_dimension_numbers<[1], [0], [0], [1], [0, 0, 1, 1], [], []>} : vector<8x128xbf16>, vector<128x128xbf16>, vector<8x128xf32> -> vector<8x128xf32>
    %45 = arith.addf %42, %44 : vector<8x128xf32>
    %c0_29 = arith.constant 0 : index
    %c0_30 = arith.constant 0 : index
    %46 = vector.load %arg12[%c0_29, %c0_30] : memref<1x128xf32, #tpu.memory_space<vmem>>, vector<1x128xf32>
    %47 = vector.broadcast %46 : vector<1x128xf32> to vector<8x128xf32>
    %48 = arith.addf %45, %47 : vector<8x128xf32>
    %49 = tpu.iota {dimensions = array<i32: 1>} : vector<8x128xi32>
    %c8_i32 = arith.constant 8 : i32
    %50 = vector.broadcast %c8_i32 : i32 to vector<8x128xi32>
    %51 = arith.cmpi slt, %49, %50 : vector<8x128xi32>
    %cst_31 = arith.constant 0xFF800000 : f32
    %52 = vector.broadcast %cst_31 : f32 to vector<8x128xf32>
    %53 = arith.select %51, %48, %52 : vector<8x128xi1>, vector<8x128xf32>
    %cst_32 = arith.constant dense<0xFF800000> : vector<8xf32>
    %54 = vector.multi_reduction <maximumf>, %53, %cst_32 [1] : vector<8x128xf32> to vector<8xf32>
    %55 = vector.shape_cast %54 : vector<8xf32> to vector<8x1xf32>
    %56 = vector.broadcast %55 : vector<8x1xf32> to vector<8x128xf32>
    %57 = arith.subf %48, %56 : vector<8x128xf32>
    %cst_33 = arith.constant 0xFF800000 : f32
    %58 = vector.broadcast %cst_33 : f32 to vector<8x128xf32>
    %59 = arith.select %51, %57, %58 : vector<8x128xi1>, vector<8x128xf32>
    %60 = arith.truncf %59 : vector<8x128xf32> to vector<8x128xbf16>
    %61 = math.exp %60 : vector<8x128xbf16>
    %62 = arith.extf %61 : vector<8x128xbf16> to vector<8x128xf32>
    %cst_34 = arith.constant dense<0.000000e+00> : vector<8xf32>
    %63 = vector.multi_reduction <add>, %62, %cst_34 [1] : vector<8x128xf32> to vector<8xf32>
    %64 = vector.shape_cast %63 : vector<8xf32> to vector<8x1xf32>
    %cst_35 = arith.constant 1.000000e+00 : f32
    %65 = vector.broadcast %cst_35 : f32 to vector<8x1xf32>
    %66 = arith.divf %65, %64 : vector<8x1xf32>
    %67 = vector.broadcast %66 : vector<8x1xf32> to vector<8x128xf32>
    %68 = arith.mulf %62, %67 : vector<8x128xf32>
    %69 = arith.truncf %48 : vector<8x128xf32> to vector<8x128xbf16>
    %70 = arith.negf %69 : vector<8x128xbf16>
    %71 = math.exp %70 : vector<8x128xbf16>
    %cst_36 = arith.constant 1.000000e+00 : bf16
    %72 = vector.broadcast %cst_36 : bf16 to vector<8x128xbf16>
    %73 = arith.addf %72, %71 : vector<8x128xbf16>
    %74 = arith.divf %72, %73 : vector<8x128xbf16>
    %75 = arith.extf %74 : vector<8x128xbf16> to vector<8x128xf32>
    %cst_37 = arith.constant 5.000000e+00 : f32
    %76 = vector.broadcast %cst_37 : f32 to vector<8x128xf32>
    %77 = arith.mulf %75, %76 : vector<8x128xf32>
    %cst_38 = arith.constant 1.000000e+00 : f32
    %78 = vector.broadcast %cst_38 : f32 to vector<8x128xf32>
    %79 = arith.addf %77, %78 : vector<8x128xf32>
    %c8_i32_39 = arith.constant 8 : i32
    %80 = vector.broadcast %c8_i32_39 : i32 to vector<8x128xi32>
    %81 = arith.cmpi eq, %49, %80 : vector<8x128xi32>
    %cst_40 = arith.constant 0.000000e+00 : f32
    %82 = vector.broadcast %cst_40 : f32 to vector<8x128xf32>
    %83 = arith.select %81, %79, %82 : vector<8x128xi1>, vector<8x128xf32>
    %84 = arith.select %51, %68, %83 : vector<8x128xi1>, vector<8x128xf32>
    %85 = arith.truncf %84 : vector<8x128xf32> to vector<8x128xbf16>
    %c0_41 = arith.constant 0 : index
    %c0_42 = arith.constant 0 : index
    %86 = vector.load %arg13[%c0_41, %c0_42] : memref<8x128xbf16, #tpu.memory_space<vmem>>, vector<8x128xbf16>
    tpu.vector_store %arg13[%c0_41, %c0_42], %85 {strides = array<i32>} : memref<8x128xbf16, #tpu.memory_space<vmem>>, vector<8x128xbf16>,
    return
  }
  func.func @transform_0(%arg0: i32) -> (i32, i32) {
    %c0_i32 = arith.constant 0 : i32
    %c0_i32_0 = arith.constant 0 : i32
    return %arg0, %c0_i32 : i32, i32
  }
  func.func @transform_1(%arg0: i32) -> (i32, i32) {
    %c0_i32 = arith.constant 0 : i32
    %c0_i32_0 = arith.constant 0 : i32
    %c0_i32_1 = arith.constant 0 : i32
    return %c0_i32, %c0_i32_0 : i32, i32
  }
  func.func @transform_2(%arg0: i32) -> (i32, i32) {
    %c0_i32 = arith.constant 0 : i32
    %c0_i32_0 = arith.constant 0 : i32
    %c0_i32_1 = arith.constant 0 : i32
    return %c0_i32, %c0_i32_0 : i32, i32
  }
  func.func @transform_3(%arg0: i32) -> (i32, i32) {
    %c0_i32 = arith.constant 0 : i32
    %c0_i32_0 = arith.constant 0 : i32
    %c0_i32_1 = arith.constant 0 : i32
    return %c0_i32, %c0_i32_0 : i32, i32
  }
  func.func @transform_4(%arg0: i32) -> (i32, i32) {
    %c0_i32 = arith.constant 0 : i32
    %c0_i32_0 = arith.constant 0 : i32
    %c0_i32_1 = arith.constant 0 : i32
    return %c0_i32, %c0_i32_0 : i32, i32
  }
  func.func @transform_5(%arg0: i32) -> (i32, i32) {
    %c0_i32 = arith.constant 0 : i32
    %c0_i32_0 = arith.constant 0 : i32
    %c0_i32_1 = arith.constant 0 : i32
    return %c0_i32, %c0_i32_0 : i32, i32
  }
  func.func @transform_6(%arg0: i32) -> (i32, i32) {
    %c0_i32 = arith.constant 0 : i32
    %c0_i32_0 = arith.constant 0 : i32
    %c0_i32_1 = arith.constant 0 : i32
    return %c0_i32, %c0_i32_0 : i32, i32
  }
  func.func @transform_7(%arg0: i32) -> (i32, i32) {
    %c0_i32 = arith.constant 0 : i32
    %c0_i32_0 = arith.constant 0 : i32
    %c0_i32_1 = arith.constant 0 : i32
    return %c0_i32, %c0_i32_0 : i32, i32
  }
  func.func @transform_8(%arg0: i32) -> (i32, i32) {
    %c0_i32 = arith.constant 0 : i32
    %c0_i32_0 = arith.constant 0 : i32
    %c0_i32_1 = arith.constant 0 : i32
    return %c0_i32, %c0_i32_0 : i32, i32
  }
  func.func @transform_9(%arg0: i32) -> (i32, i32) {
    %c0_i32 = arith.constant 0 : i32
    %c0_i32_0 = arith.constant 0 : i32
    %c0_i32_1 = arith.constant 0 : i32
    return %c0_i32, %c0_i32_0 : i32, i32
  }
  func.func @transform_10(%arg0: i32) -> (i32, i32) {
    %c0_i32 = arith.constant 0 : i32
    %c0_i32_0 = arith.constant 0 : i32
    %c0_i32_1 = arith.constant 0 : i32
    return %c0_i32, %c0_i32_0 : i32, i32
  }
  func.func @transform_11(%arg0: i32) -> (i32, i32) {
    %c0_i32 = arith.constant 0 : i32
    %c0_i32_0 = arith.constant 0 : i32
    %c0_i32_1 = arith.constant 0 : i32
    return %c0_i32, %c0_i32_0 : i32, i32
  }
  func.func @transform_12(%arg0: i32) -> (i32, i32) {
    %c0_i32 = arith.constant 0 : i32
    %c0_i32_0 = arith.constant 0 : i32
    return %arg0, %c0_i32 : i32, i32
  }
}

</mosaic_0001>

<llo_original>
// kernel: tpu_custom_call.1
$region0: #{tpu_custom_call.1}
  #allocation0 [shape = 'u32[]', space=smem, size = 0x4, offset = 0x4, fixed_abs, tag = 'smem constant byte address 0x4 - core index']
  #allocation1 [shape = 'u32[144,128]{1,0:T(1,128)}', space=vmem, size = 0x12000, scoped, tag = 'internal scratch']
  %s0 = inlined_call_operand.hbm [shape: f32[8,32], index: 0, kind: input, shape index: {}]
  %s1 = inlined_call_operand.hbm [shape: bf16[32,256], index: 1, kind: input, shape index: {}]
  %s2 = inlined_call_operand.vmem [shape: f32[1,256], index: 2, kind: input, shape index: {}]
  %s3 = inlined_call_operand.hbm [shape: bf16[256,256], index: 3, kind: input, shape index: {}]
  %s4 = inlined_call_operand.vmem [shape: f32[1,256], index: 4, kind: input, shape index: {}]
  %s5 = inlined_call_operand.hbm [shape: bf16[256,128], index: 5, kind: input, shape index: {}]
  %s6 = inlined_call_operand.vmem [shape: f32[1,128], index: 6, kind: input, shape index: {}]
  %s7 = inlined_call_operand.hbm [shape: bf16[128,128], index: 7, kind: input, shape index: {}]
  %s8 = inlined_call_operand.vmem [shape: f32[1,128], index: 8, kind: input, shape index: {}]
  %s9 = inlined_call_operand.hbm [shape: bf16[128,128], index: 9, kind: input, shape index: {}]
  %s10 = inlined_call_operand.hbm [shape: bf16[128,128], index: 10, kind: input, shape index: {}]
  %s11 = inlined_call_operand.vmem [shape: f32[1,128], index: 11, kind: input, shape index: {}]
  %s12 = inlined_call_operand.hbm [shape: bf16[8,128], index: 12, kind: output, shape index: {}]
  %s13 = sld [smem:[#allocation0]]
  $region86: #{tpu_custom_call.1} parent=0
    _
  %s15 = ssub.s32 1, %s13
  %s16 = scalar_select 0, %s15, %s13
  $region1: #{tpu_custom_call.1} parent=0
    #allocation2 [shape = 'u8[4096]{0}', space=vmem, size = 0x1000, scoped, tag = 'input window, operand 0, single buffered']
    #allocation3 [shape = 's32[1]{0}', space=sflag, size = 0x4, scoped, tag = 'scoped memory for tpu_custom_call.1']
    #allocation4 [shape = 's32[1]{0}', space=sflag, size = 0x4, scoped, tag = 'scoped memory for tpu_custom_call.1']
    #allocation5 [shape = 'u8[16384]{0}', space=vmem, size = 0x4000, scoped, tag = 'input window, operand 1, single buffered']
    #allocation6 [shape = 's32[1]{0}', space=sflag, size = 0x4, scoped, tag = 'scoped memory for tpu_custom_call.1']
    #allocation7 [shape = 'u8[131072]{0}', space=vmem, size = 0x20000, scoped, tag = 'input window, operand 3, single buffered']
    #allocation8 [shape = 'u8[65536]{0}', space=vmem, size = 0x10000, scoped, tag = 'input window, operand 5, single buffered']
    #allocation9 [shape = 's32[1]{0}', space=sflag, size = 0x4, scoped, tag = 'scoped memory for tpu_custom_call.1']
    #allocation10 [shape = 'u8[32768]{0}', space=vmem, size = 0x8000, scoped, tag = 'input window, operand 7, single buffered']
    #allocation11 [shape = 'u8[32768]{0}', space=vmem, size = 0x8000, scoped, tag = 'input window, operand 9, single buffered']
    #allocation12 [shape = 's32[1]{0}', space=sflag, size = 0x4, scoped, tag = 'scoped memory for tpu_custom_call.1']
    #allocation13 [shape = 'u8[32768]{0}', space=vmem, size = 0x8000, scoped, tag = 'input window, operand 10, single buffered']
    #allocation14 [shape = 'u8[2048]{0}', space=vmem, size = 0x800, scoped, tag = 'output window, operand 0, single buffered']
    %17 = vsyncpa [#allocation3], 0
    %18 = vsyncpa [#allocation6], 0
    %19 = vsyncpa [#allocation9], 0
    %20 = vsyncpa [#allocation12], 0
    %21 = vsyncpa [#allocation4], 0
    // Predicated region
    $region2: #{tpu_custom_call.1} parent=1 // pred_check
      _
    $region3: #{tpu_custom_call.1} parent=1 // pred_check_branch
      %23 = sbr.rel (0) target = $region5
    $region4: #{tpu_custom_call.1} parent=1 // pred_region
      %s25 = ssub.s32 128, 128
      %26 = vsyncadd [#allocation3], %s25
      %s28 = sshll.u32 [#allocation2], 4
      %s29 = int_to_ptr.vmem [resolvable:$true] %s28
      %31 = dma.hbm_to_vmem [thread:$0]  %s0, 128, %s29, [#allocation3]
    $region5: #{tpu_custom_call.1} parent=1 // pred_fallthru
      _
    // Predicated region
    $region6: #{tpu_custom_call.1} parent=1 // pred_check
      _
    $region7: #{tpu_custom_call.1} parent=1 // pred_check_branch
      %33 = sbr.rel (0) target = $region9
    $region8: #{tpu_custom_call.1} parent=1 // pred_region
      %s35 = ssub.s32 512, 512
      %36 = vsyncadd [#allocation6], %s35
      %s37 = sshll.u32 [#allocation5], 4
      %s38 = int_to_ptr.vmem [resolvable:$true] %s37
      %43 = dma.hbm_to_vmem [thread:$0]  %s1, 512, %s38, [#allocation6], 128, 128, 8
    $region9: #{tpu_custom_call.1} parent=1 // pred_fallthru
      _
    // Predicated region
    $region10: #{tpu_custom_call.1} parent=1 // pred_check
      _
    $region11: #{tpu_custom_call.1} parent=1 // pred_check_branch
      %45 = sbr.rel (0) target = $region13
    $region12: #{tpu_custom_call.1} parent=1 // pred_region
      _
    $region13: #{tpu_custom_call.1} parent=1 // pred_fallthru
      _
    // Predicated region
    $region14: #{tpu_custom_call.1} parent=1 // pred_check
      _
    $region15: #{tpu_custom_call.1} parent=1 // pred_check_branch
      %47 = sbr.rel (0) target = $region17
    $region16: #{tpu_custom_call.1} parent=1 // pred_region
      %s49 = ssub.s32 4096, 4096
      %50 = vsyncadd [#allocation6], %s49
      %s51 = sshll.u32 [#allocation7], 4
      %s52 = int_to_ptr.vmem [resolvable:$true] %s51
      %57 = dma.hbm_to_vmem [thread:$0]  %s3, 4096, %s52, [#allocation6], 128, 128, 8
    $region17: #{tpu_custom_call.1} parent=1 // pred_fallthru
      _
    // Predicated region
    $region18: #{tpu_custom_call.1} parent=1 // pred_check
      _
    $region19: #{tpu_custom_call.1} parent=1 // pred_check_branch
      %59 = sbr.rel (0) target = $region21
    $region20: #{tpu_custom_call.1} parent=1 // pred_region
      _
    $region21: #{tpu_custom_call.1} parent=1 // pred_fallthru
      _
    // Predicated region
    $region22: #{tpu_custom_call.1} parent=1 // pred_check
      _
    $region23: #{tpu_custom_call.1} parent=1 // pred_check_branch
      %61 = sbr.rel (0) target = $region25
    $region24: #{tpu_custom_call.1} parent=1 // pred_region
      %s63 = ssub.s32 2048, 2048
      %64 = vsyncadd [#allocation9], %s63
      %s65 = sshll.u32 [#allocation8], 4
      %s66 = int_to_ptr.vmem [resolvable:$true] %s65
      %71 = dma.hbm_to_vmem [thread:$0]  %s5, 2048, %s66, [#allocation9], 64, 64, 4
    $region25: #{tpu_custom_call.1} parent=1 // pred_fallthru
      _
    // Predicated region
    $region26: #{tpu_custom_call.1} parent=1 // pred_check
      _
    $region27: #{tpu_custom_call.1} parent=1 // pred_check_branch
      %73 = sbr.rel (0) target = $region29
    $region28: #{tpu_custom_call.1} parent=1 // pred_region
      _
    $region29: #{tpu_custom_call.1} parent=1 // pred_fallthru
      _
    // Predicated region
    $region30: #{tpu_custom_call.1} parent=1 // pred_check
      _
    $region31: #{tpu_custom_call.1} parent=1 // pred_check_branch
      %75 = sbr.rel (0) target = $region33
    $region32: #{tpu_custom_call.1} parent=1 // pred_region
      %s77 = ssub.s32 1024, 1024
      %78 = vsyncadd [#allocation9], %s77
      %s79 = sshll.u32 [#allocation10], 4
      %s80 = int_to_ptr.vmem [resolvable:$true] %s79
      %85 = dma.hbm_to_vmem [thread:$0]  %s7, 1024, %s80, [#allocation9], 64, 64, 4
    $region33: #{tpu_custom_call.1} parent=1 // pred_fallthru
      _
    // Predicated region
    $region34: #{tpu_custom_call.1} parent=1 // pred_check
      _
    $region35: #{tpu_custom_call.1} parent=1 // pred_check_branch
      %87 = sbr.rel (0) target = $region37
    $region36: #{tpu_custom_call.1} parent=1 // pred_region
      _
    $region37: #{tpu_custom_call.1} parent=1 // pred_fallthru
      _
    // Predicated region
    $region38: #{tpu_custom_call.1} parent=1 // pred_check
      _
    $region39: #{tpu_custom_call.1} parent=1 // pred_check_branch
      %89 = sbr.rel (0) target = $region41
    $region40: #{tpu_custom_call.1} parent=1 // pred_region
      %s91 = ssub.s32 1024, 1024
      %92 = vsyncadd [#allocation12], %s91
      %s93 = sshll.u32 [#allocation11], 4
      %s94 = int_to_ptr.vmem [resolvable:$true] %s93
      %99 = dma.hbm_to_vmem [thread:$0]  %s9, 1024, %s94, [#allocation12], 64, 64, 4
    $region41: #{tpu_custom_call.1} parent=1 // pred_fallthru
      _
    // Predicated region
    $region42: #{tpu_custom_call.1} parent=1 // pred_check
      _
    $region43: #{tpu_custom_call.1} parent=1 // pred_check_branch
      %101 = sbr.rel (0) target = $region45
    $region44: #{tpu_custom_call.1} parent=1 // pred_region
      %s103 = ssub.s32 1024, 1024
      %104 = vsyncadd [#allocation12], %s103
      %s105 = sshll.u32 [#allocation13], 4
      %s106 = int_to_ptr.vmem [resolvable:$true] %s105
      %111 = dma.hbm_to_vmem [thread:$0]  %s10, 1024, %s106, [#allocation12], 64, 64, 4
    $region45: #{tpu_custom_call.1} parent=1 // pred_fallthru
      _
    // Predicated region
    $region46: #{tpu_custom_call.1} parent=1 // pred_check
      _
    $region47: #{tpu_custom_call.1} parent=1 // pred_check_branch
      %113 = sbr.rel (0) target = $region49
    $region48: #{tpu_custom_call.1} parent=1 // pred_region
      _
    $region49: #{tpu_custom_call.1} parent=1 // pred_fallthru
      _
    // Predicated region
    $region50: #{tpu_custom_call.1} parent=1 // pred_check
      _
    $region51: #{tpu_custom_call.1} parent=1 // pred_check_branch
      %115 = sbr.rel (0) target = $region53
    $region52: #{tpu_custom_call.1} parent=1 // pred_region
      %116 = dma.done [#allocation3], 128
    $region53: #{tpu_custom_call.1} parent=1 // pred_fallthru
      _
    // Predicated region
    $region54: #{tpu_custom_call.1} parent=1 // pred_check
      _
    $region55: #{tpu_custom_call.1} parent=1 // pred_check_branch
      %118 = sbr.rel (0) target = $region57
    $region56: #{tpu_custom_call.1} parent=1 // pred_region
      %119 = dma.done [#allocation6], 512
    $region57: #{tpu_custom_call.1} parent=1 // pred_fallthru
      _
    // Predicated region
    $region58: #{tpu_custom_call.1} parent=1 // pred_check
      _
    $region59: #{tpu_custom_call.1} parent=1 // pred_check_branch
      %121 = sbr.rel (0) target = $region61
    $region60: #{tpu_custom_call.1} parent=1 // pred_region
      %122 = dma.done [#allocation6], 4096
    $region61: #{tpu_custom_call.1} parent=1 // pred_fallthru
      _
    // Predicated region
    $region62: #{tpu_custom_call.1} parent=1 // pred_check
      _
    $region63: #{tpu_custom_call.1} parent=1 // pred_check_branch
      %124 = sbr.rel (0) target = $region65
    $region64: #{tpu_custom_call.1} parent=1 // pred_region
      %125 = dma.done [#allocation9], 2048
    $region65: #{tpu_custom_call.1} parent=1 // pred_fallthru
      _
    // Predicated region
    $region66: #{tpu_custom_call.1} parent=1 // pred_check
      _
    $region67: #{tpu_custom_call.1} parent=1 // pred_check_branch
      %127 = sbr.rel (0) target = $region69
    $region68: #{tpu_custom_call.1} parent=1 // pred_region
      %128 = dma.done [#allocation9], 1024
    $region69: #{tpu_custom_call.1} parent=1 // pred_fallthru
      _
    // Predicated region
    $region70: #{tpu_custom_call.1} parent=1 // pred_check
      _
    $region71: #{tpu_custom_call.1} parent=1 // pred_check_branch
      %130 = sbr.rel (0) target = $region73
    $region72: #{tpu_custom_call.1} parent=1 // pred_region
      %131 = dma.done [#allocation12], 1024
    $region73: #{tpu_custom_call.1} parent=1 // pred_fallthru
      _
    // Predicated region
    $region74: #{tpu_custom_call.1} parent=1 // pred_check
      _
    $region75: #{tpu_custom_call.1} parent=1 // pred_check_branch
      %133 = sbr.rel (0) target = $region77
    $region76: #{tpu_custom_call.1} parent=1 // pred_region
      %134 = dma.done [#allocation12], 1024
    $region77: #{tpu_custom_call.1} parent=1 // pred_fallthru
      _
    %v137 = vld [vmem:[#allocation2] sm:$0xff]
    %v138 = vpack.c.bf16 %v137, %v137
    %v139 = vld [vmem:[#allocation5] sm:$0xff]
    %v140 = vld [vmem:[#allocation5 + $0x8] sm:$0xff]
    %v141 = vld [vmem:[#allocation5 + $0x10] sm:$0xff]
    %v142 = vld [vmem:[#allocation5 + $0x18] sm:$0xff]
    %v143 = vld [vmem:[%s2] sm:$0x3]
    %v145 = vlaneseq
    %v146 = vshrl.u32 %v145, 7
    %v147 = vsub.s32 0, %v146
    %v148 = vrot.slane %v143, %v147
    %v149 = vlaneseq
    %v150 = vshrl.u32 %v149, 7
    %v151 = vsub.s32 1, %v150
    %v152 = vrot.slane %v143, %v151
    %v159 = vunpack.c.l.b16 %v139
    %v160 = vunpack.c.h.b16 %v139
    %v161 = vunpack.c.l.b16 %v140
    %v162 = vunpack.c.h.b16 %v140
    %v163 = vunpack.c.l.b16 %v141
    %v164 = vunpack.c.h.b16 %v141
    %v165 = vunpack.c.l.b16 %v142
    %v166 = vunpack.c.h.b16 %v142
    %v167 = vpack.c.b16 %v161, %v159
    %v168 = vpack.c.b16 %v162, %v160
    %v169 = vpack.c.b16 %v165, %v163
    %v170 = vpack.c.b16 %v166, %v164
    %vm175 = vcmask 261120
    %v177 = vsel %vm175, %v138, 0
    %179 = vmatprep.subr.bf16.mxu0 0
    %180 = vmatpush1.bf16.msra.mxu0 0
    %181 = vmatprep.subr.bf16.mxu0 0
    %182 = vmatpush1.bf16.msra.mxu0 0
    %183 = vmatprep.subr.bf16.mxu0 0
    %184 = vmatpush1.bf16.msra.mxu0 0
    %185 = vmatprep.subr.bf16.mxu0 0
    %186 = vmatpush1.bf16.msra.mxu0 0
    %187 = vmatprep.subr.bf16.mxu0 0
    %188 = vmatpush1.bf16.msra.mxu0 0
    %189 = vmatprep.subr.bf16.mxu0 0
    %190 = vmatpush1.bf16.msra.mxu0 0
    %191 = vmatprep.subr.bf16.mxu0 %v170
    %192 = vmatpush1.bf16.msra.mxu0 %v169
    %193 = vmatprep.subr.bf16.mxu0 %v168
    %194 = vmatpush1.bf16.msra.mxu0 %v167
    %195 = vmatprep.subr.bf16.mxu0 0
    %196 = vmatpush2.bf16.msra.mxu0 0
    %197 = vmatprep.subr.bf16.mxu0 0
    %198 = vmatpush2.bf16.msra.mxu0 0
    %199 = vmatprep.subr.bf16.mxu0 0
    %200 = vmatpush2.bf16.msra.mxu0 0
    %201 = vmatprep.subr.bf16.mxu0 0
    %202 = vmatpush2.bf16.msra.mxu0 0
    %203 = vmatprep.subr.bf16.mxu0 0
    %204 = vmatpush2.bf16.msra.mxu0 0
    %205 = vmatprep.subr.bf16.mxu0 0
    %206 = vmatpush2.bf16.msra.mxu0 0
    %207 = vmatprep.subr.bf16.mxu0 0
    %208 = vmatpush2.bf16.msra.mxu0 0
    %209 = vmatprep.subr.bf16.mxu0 0
    %210 = vmatpush2.bf16.msra.mxu0 0
    %211 = vmatprep.mubr.bf16.mxu0 0
    %212 = vmatmul.mubr.bf16.gmra.mxu0 %v177
    %v213 = vpop.f32.mrf.mxu0
    %v214 = vadd.f32 %v148, %v213
    %v215 = vpop.f32.mrf.mxu0
    %v216 = vadd.f32 %v152, %v215
    %v217 = vpop.f32.mrf.mxu0
    %v218 = vpop.f32.mrf.mxu0
    %219 = vdwg.mxu0
    %v220 = vpack.c.bf16 %v214, %v214
    %v221 = vpack.c.bf16 %v216, %v216
    %v222 = vld [vmem:[#allocation7] sm:$0xff]
    %v223 = vld [vmem:[#allocation7 + $0x8] sm:$0xff]
    %v224 = vld [vmem:[#allocation7 + $0x10] sm:$0xff]
    %v225 = vld [vmem:[#allocation7 + $0x18] sm:$0xff]
    %v226 = vld [vmem:[#allocation7 + $0x20] sm:$0xff]
    %v227 = vld [vmem:[#allocation7 + $0x28] sm:$0xff]
    %v228 = vld [vmem:[#allocation7 + $0x30] sm:$0xff]
    %v229 = vld [vmem:[#allocation7 + $0x38] sm:$0xff]
    %v230 = vld [vmem:[#allocation7 + $0x40] sm:$0xff]
    %v231 = vld [vmem:[#allocation7 + $0x48] sm:$0xff]
    %v232 = vld [vmem:[#allocation7 + $0x50] sm:$0xff]
    %v233 = vld [vmem:[#allocation7 + $0x58] sm:$0xff]
    %v234 = vld [vmem:[#allocation7 + $0x60] sm:$0xff]
    %v235 = vld [vmem:[#allocation7 + $0x68] sm:$0xff]
    %v236 = vld [vmem:[#allocation7 + $0x70] sm:$0xff]
    %v237 = vld [vmem:[#allocation7 + $0x78] sm:$0xff]
    %v238 = vld [vmem:[#allocation7 + $0x80] sm:$0xff]
    %v239 = vld [vmem:[#allocation7 + $0x88] sm:$0xff]
    %v240 = vld [vmem:[#allocation7 + $0x90] sm:$0xff]
    %v241 = vld [vmem:[#allocation7 + $0x98] sm:$0xff]
    %v242 = vld [vmem:[#allocation7 + $0xa0] sm:$0xff]
    %v243 = vld [vmem:[#allocation7 + $0xa8] sm:$0xff]
    %v244 = vld [vmem:[#allocation7 + $0xb0] sm:$0xff]
    %v245 = vld [vmem:[#allocation7 + $0xb8] sm:$0xff]
    %v246 = vld [vmem:[#allocation7 + $0xc0] sm:$0xff]
    %v247 = vld [vmem:[#allocation7 + $0xc8] sm:$0xff]
    %v248 = vld [vmem:[#allocation7 + $0xd0] sm:$0xff]
    %v249 = vld [vmem:[#allocation7 + $0xd8] sm:$0xff]
    %v250 = vld [vmem:[#allocation7 + $0xe0] sm:$0xff]
    %v251 = vld [vmem:[#allocation7 + $0xe8] sm:$0xff]
    %v252 = vld [vmem:[#allocation7 + $0xf0] sm:$0xff]
    %v253 = vld [vmem:[#allocation7 + $0xf8] sm:$0xff]
    %v254 = vld [vmem:[%s4] sm:$0x3]
    %v256 = vlaneseq
    %v257 = vshrl.u32 %v256, 7
    %v258 = vsub.s32 0, %v257
    %v259 = vrot.slane %v254, %v258
    %v260 = vlaneseq
    %v261 = vshrl.u32 %v260, 7
    %v262 = vsub.s32 1, %v261
    %v263 = vrot.slane %v254, %v262
    %v298 = vunpack.c.l.b16 %v222
    %v299 = vunpack.c.h.b16 %v222
    %v300 = vunpack.c.l.b16 %v223
    %v301 = vunpack.c.h.b16 %v223
    %v302 = vunpack.c.l.b16 %v224
    %v303 = vunpack.c.h.b16 %v224
    %v304 = vunpack.c.l.b16 %v225
    %v305 = vunpack.c.h.b16 %v225
    %v306 = vunpack.c.l.b16 %v226
    %v307 = vunpack.c.h.b16 %v226
    %v308 = vunpack.c.l.b16 %v227
    %v309 = vunpack.c.h.b16 %v227
    %v310 = vunpack.c.l.b16 %v228
    %v311 = vunpack.c.h.b16 %v228
    %v312 = vunpack.c.l.b16 %v229
    %v313 = vunpack.c.h.b16 %v229
    %v314 = vunpack.c.l.b16 %v230
    %v315 = vunpack.c.h.b16 %v230
    %v316 = vunpack.c.l.b16 %v231
    %v317 = vunpack.c.h.b16 %v231
    %v318 = vunpack.c.l.b16 %v232
    %v319 = vunpack.c.h.b16 %v232
    %v320 = vunpack.c.l.b16 %v233
    %v321 = vunpack.c.h.b16 %v233
    %v322 = vunpack.c.l.b16 %v234
    %v323 = vunpack.c.h.b16 %v234
    %v324 = vunpack.c.l.b16 %v235
    %v325 = vunpack.c.h.b16 %v235
    %v326 = vunpack.c.l.b16 %v236
    %v327 = vunpack.c.h.b16 %v236
    %v328 = vunpack.c.l.b16 %v237
    %v329 = vunpack.c.h.b16 %v237
    %v330 = vunpack.c.l.b16 %v238
    %v331 = vunpack.c.h.b16 %v238
    %v332 = vunpack.c.l.b16 %v239
    %v333 = vunpack.c.h.b16 %v239
    %v334 = vunpack.c.l.b16 %v240
    %v335 = vunpack.c.h.b16 %v240
    %v336 = vunpack.c.l.b16 %v241
    %v337 = vunpack.c.h.b16 %v241
    %v338 = vunpack.c.l.b16 %v242
    %v339 = vunpack.c.h.b16 %v242
    %v340 = vunpack.c.l.b16 %v243
    %v341 = vunpack.c.h.b16 %v243
    %v342 = vunpack.c.l.b16 %v244
    %v343 = vunpack.c.h.b16 %v244
    %v344 = vunpack.c.l.b16 %v245
    %v345 = vunpack.c.h.b16 %v245
    %v346 = vunpack.c.l.b16 %v246
    %v347 = vunpack.c.h.b16 %v246
    %v348 = vunpack.c.l.b16 %v247
    %v349 = vunpack.c.h.b16 %v247
    %v350 = vunpack.c.l.b16 %v248
    %v351 = vunpack.c.h.b16 %v248
    %v352 = vunpack.c.l.b16 %v249
    %v353 = vunpack.c.h.b16 %v249
    %v354 = vunpack.c.l.b16 %v250
    %v355 = vunpack.c.h.b16 %v250
    %v356 = vunpack.c.l.b16 %v251
    %v357 = vunpack.c.h.b16 %v251
    %v358 = vunpack.c.l.b16 %v252
    %v359 = vunpack.c.h.b16 %v252
    %v360 = vunpack.c.l.b16 %v253
    %v361 = vunpack.c.h.b16 %v253
    %v362 = vpack.c.b16 %v300, %v298
    %v363 = vpack.c.b16 %v301, %v299
    %v364 = vpack.c.b16 %v304, %v302
    %v365 = vpack.c.b16 %v305, %v303
    %v366 = vpack.c.b16 %v308, %v306
    %v367 = vpack.c.b16 %v309, %v307
    %v368 = vpack.c.b16 %v312, %v310
    %v369 = vpack.c.b16 %v313, %v311
    %v370 = vpack.c.b16 %v316, %v314
    %v371 = vpack.c.b16 %v317, %v315
    %v372 = vpack.c.b16 %v320, %v318
    %v373 = vpack.c.b16 %v321, %v319
    %v374 = vpack.c.b16 %v324, %v322
    %v375 = vpack.c.b16 %v325, %v323
    %v376 = vpack.c.b16 %v328, %v326
    %v377 = vpack.c.b16 %v329, %v327
    %v378 = vpack.c.b16 %v332, %v330
    %v379 = vpack.c.b16 %v333, %v331
    %v380 = vpack.c.b16 %v336, %v334
    %v381 = vpack.c.b16 %v337, %v335
    %v382 = vpack.c.b16 %v340, %v338
    %v383 = vpack.c.b16 %v341, %v339
    %v384 = vpack.c.b16 %v344, %v342
    %v385 = vpack.c.b16 %v345, %v343
    %v386 = vpack.c.b16 %v348, %v346
    %v387 = vpack.c.b16 %v349, %v347
    %v388 = vpack.c.b16 %v352, %v350
    %v389 = vpack.c.b16 %v353, %v351
    %v390 = vpack.c.b16 %v356, %v354
    %v391 = vpack.c.b16 %v357, %v355
    %v392 = vpack.c.b16 %v360, %v358
    %v393 = vpack.c.b16 %v361, %v359
    %426 = vmatprep.subr.bf16.mxu0 %v377
    %427 = vmatpush1.bf16.msra.mxu0 %v376
    %428 = vmatprep.subr.bf16.mxu0 %v375
    %429 = vmatpush1.bf16.msra.mxu0 %v374
    %430 = vmatprep.subr.bf16.mxu0 %v373
    %431 = vmatpush1.bf16.msra.mxu0 %v372
    %432 = vmatprep.subr.bf16.mxu0 %v371
    %433 = vmatpush1.bf16.msra.mxu0 %v370
    %434 = vmatprep.subr.bf16.mxu0 %v369
    %435 = vmatpush1.bf16.msra.mxu0 %v368
    %436 = vmatprep.subr.bf16.mxu0 %v367
    %437 = vmatpush1.bf16.msra.mxu0 %v366
    %438 = vmatprep.subr.bf16.mxu0 %v365
    %439 = vmatpush1.bf16.msra.mxu0 %v364
    %440 = vmatprep.subr.bf16.mxu0 %v363
    %441 = vmatpush1.bf16.msra.mxu0 %v362
    %442 = vmatprep.subr.bf16.mxu0 %v393
    %443 = vmatpush2.bf16.msra.mxu0 %v392
    %444 = vmatprep.subr.bf16.mxu0 %v391
    %445 = vmatpush2.bf16.msra.mxu0 %v390
    %446 = vmatprep.subr.bf16.mxu0 %v389
    %447 = vmatpush2.bf16.msra.mxu0 %v388
    %448 = vmatprep.subr.bf16.mxu0 %v387
    %449 = vmatpush2.bf16.msra.mxu0 %v386
    %450 = vmatprep.subr.bf16.mxu0 %v385
    %451 = vmatpush2.bf16.msra.mxu0 %v384
    %452 = vmatprep.subr.bf16.mxu0 %v383
    %453 = vmatpush2.bf16.msra.mxu0 %v382
    %454 = vmatprep.subr.bf16.mxu0 %v381
    %455 = vmatpush2.bf16.msra.mxu0 %v380
    %456 = vmatprep.subr.bf16.mxu0 %v379
    %457 = vmatpush2.bf16.msra.mxu0 %v378
    %458 = vmatprep.mubr.bf16.mxu0 %v221
    %459 = vmatmul.mubr.bf16.gmra.mxu0 %v220
    %v460 = vpop.f32.mrf.mxu0
    %v461 = vadd.f32 %v259, %v460
    %v462 = vpop.f32.mrf.mxu0
    %v463 = vadd.f32 %v263, %v462
    %v464 = vpop.f32.mrf.mxu0
    %v465 = vpop.f32.mrf.mxu0
    %466 = vdwg.mxu0
    %v467 = vpack.c.bf16 %v461, %v461
    %v468 = vpack.c.bf16 %v463, %v463
    %v469 = vxor.u32 %v467, 2147516416
    %v470 = vxor.u32 %v468, 2147516416
    %v472 = vmul.bf16 %v469, 1069105081
    %v473 = vpow.bf16.pop %v472
    %v475 = vmul.bf16 %v470, 1069105081
    %v476 = vpow.bf16.pop %v475
    %v477 = vadd.bf16 %v473, 1065369472
    %v478 = vadd.bf16 %v476, 1065369472
    %v479 = vrcp.bf16.pop %v477
    %v480 = vmul.bf16 1065369472, %v479
    %v481 = vrcp.bf16.pop %v478
    %v482 = vmul.bf16 1065369472, %v481
    %v483 = vld [vmem:[#allocation8] sm:$0xf]
    %v484 = vld [vmem:[#allocation8 + $0x4] sm:$0xf]
    %v485 = vld [vmem:[#allocation8 + $0x8] sm:$0xf]
    %v486 = vld [vmem:[#allocation8 + $0xc] sm:$0xf]
    %v487 = vld [vmem:[#allocation8 + $0x10] sm:$0xf]
    %v488 = vld [vmem:[#allocation8 + $0x14] sm:$0xf]
    %v489 = vld [vmem:[#allocation8 + $0x18] sm:$0xf]
    %v490 = vld [vmem:[#allocation8 + $0x1c] sm:$0xf]
    %v491 = vld [vmem:[#allocation8 + $0x20] sm:$0xf]
    %v492 = vld [vmem:[#allocation8 + $0x24] sm:$0xf]
    %v493 = vld [vmem:[#allocation8 + $0x28] sm:$0xf]
    %v494 = vld [vmem:[#allocation8 + $0x2c] sm:$0xf]
    %v495 = vld [vmem:[#allocation8 + $0x30] sm:$0xf]
    %v496 = vld [vmem:[#allocation8 + $0x34] sm:$0xf]
    %v497 = vld [vmem:[#allocation8 + $0x38] sm:$0xf]
    %v498 = vld [vmem:[#allocation8 + $0x3c] sm:$0xf]
    %v499 = vld [vmem:[#allocation8 + $0x40] sm:$0xf]
    %v500 = vld [vmem:[#allocation8 + $0x44] sm:$0xf]
    %v501 = vld [vmem:[#allocation8 + $0x48] sm:$0xf]
    %v502 = vld [vmem:[#allocation8 + $0x4c] sm:$0xf]
    %v503 = vld [vmem:[#allocation8 + $0x50] sm:$0xf]
    %v504 = vld [vmem:[#allocation8 + $0x54] sm:$0xf]
    %v505 = vld [vmem:[#allocation8 + $0x58] sm:$0xf]
    %v506 = vld [vmem:[#allocation8 + $0x5c] sm:$0xf]
    %v507 = vld [vmem:[#allocation8 + $0x60] sm:$0xf]
    %v508 = vld [vmem:[#allocation8 + $0x64] sm:$0xf]
    %v509 = vld [vmem:[#allocation8 + $0x68] sm:$0xf]
    %v510 = vld [vmem:[#allocation8 + $0x6c] sm:$0xf]
    %v511 = vld [vmem:[#allocation8 + $0x70] sm:$0xf]
    %v512 = vld [vmem:[#allocation8 + $0x74] sm:$0xf]
    %v513 = vld [vmem:[#allocation8 + $0x78] sm:$0xf]
    %v514 = vld [vmem:[#allocation8 + $0x7c] sm:$0xf]
    %v515 = vld [vmem:[%s6] sm:$0x1]
    %v517 = vlaneseq
    %v518 = vshrl.u32 %v517, 7
    %v519 = vsub.s32 0, %v518
    %v520 = vrot.slane %v515, %v519
    %v554 = vunpack.c.l.b16 %v483
    %v555 = vunpack.c.l.b16 %v484
    %v556 = vunpack.c.l.b16 %v485
    %v557 = vunpack.c.l.b16 %v486
    %v558 = vunpack.c.l.b16 %v487
    %v559 = vunpack.c.l.b16 %v488
    %v560 = vunpack.c.l.b16 %v489
    %v561 = vunpack.c.l.b16 %v490
    %v562 = vunpack.c.l.b16 %v491
    %v563 = vunpack.c.l.b16 %v492
    %v564 = vunpack.c.l.b16 %v493
    %v565 = vunpack.c.l.b16 %v494
    %v566 = vunpack.c.l.b16 %v495
    %v567 = vunpack.c.l.b16 %v496
    %v568 = vunpack.c.l.b16 %v497
    %v569 = vunpack.c.l.b16 %v498
    %v570 = vunpack.c.l.b16 %v499
    %v571 = vunpack.c.l.b16 %v500
    %v572 = vunpack.c.l.b16 %v501
    %v573 = vunpack.c.l.b16 %v502
    %v574 = vunpack.c.l.b16 %v503
    %v575 = vunpack.c.l.b16 %v504
    %v576 = vunpack.c.l.b16 %v505
    %v577 = vunpack.c.l.b16 %v506
    %v578 = vunpack.c.l.b16 %v507
    %v579 = vunpack.c.l.b16 %v508
    %v580 = vunpack.c.l.b16 %v509
    %v581 = vunpack.c.l.b16 %v510
    %v582 = vunpack.c.l.b16 %v511
    %v583 = vunpack.c.l.b16 %v512
    %v584 = vunpack.c.l.b16 %v513
    %v585 = vunpack.c.l.b16 %v514
    %v586 = vpack.c.b16 %v555, %v554
    %v587 = vpack.c.b16 %v557, %v556
    %v588 = vpack.c.b16 %v559, %v558
    %v589 = vpack.c.b16 %v561, %v560
    %v590 = vpack.c.b16 %v563, %v562
    %v591 = vpack.c.b16 %v565, %v564
    %v592 = vpack.c.b16 %v567, %v566
    %v593 = vpack.c.b16 %v569, %v568
    %v594 = vpack.c.b16 %v571, %v570
    %v595 = vpack.c.b16 %v573, %v572
    %v596 = vpack.c.b16 %v575, %v574
    %v597 = vpack.c.b16 %v577, %v576
    %v598 = vpack.c.b16 %v579, %v578
    %v599 = vpack.c.b16 %v581, %v580
    %v600 = vpack.c.b16 %v583, %v582
    %v601 = vpack.c.b16 %v585, %v584
    %618 = vmatprep.subr.bf16.mxu0 0
    %619 = vmatpush1.bf16.msra.mxu0 %v593
    %620 = vmatprep.subr.bf16.mxu0 0
    %621 = vmatpush1.bf16.msra.mxu0 %v592
    %622 = vmatprep.subr.bf16.mxu0 0
    %623 = vmatpush1.bf16.msra.mxu0 %v591
    %624 = vmatprep.subr.bf16.mxu0 0
    %625 = vmatpush1.bf16.msra.mxu0 %v590
    %626 = vmatprep.subr.bf16.mxu0 0
    %627 = vmatpush1.bf16.msra.mxu0 %v589
    %628 = vmatprep.subr.bf16.mxu0 0
    %629 = vmatpush1.bf16.msra.mxu0 %v588
    %630 = vmatprep.subr.bf16.mxu0 0
    %631 = vmatpush1.bf16.msra.mxu0 %v587
    %632 = vmatprep.subr.bf16.mxu0 0
    %633 = vmatpush1.bf16.msra.mxu0 %v586
    %634 = vmatprep.subr.bf16.mxu0 0
    %635 = vmatpush2.bf16.msra.mxu0 %v601
    %636 = vmatprep.subr.bf16.mxu0 0
    %637 = vmatpush2.bf16.msra.mxu0 %v600
    %638 = vmatprep.subr.bf16.mxu0 0
    %639 = vmatpush2.bf16.msra.mxu0 %v599
    %640 = vmatprep.subr.bf16.mxu0 0
    %641 = vmatpush2.bf16.msra.mxu0 %v598
    %642 = vmatprep.subr.bf16.mxu0 0
    %643 = vmatpush2.bf16.msra.mxu0 %v597
    %644 = vmatprep.subr.bf16.mxu0 0
    %645 = vmatpush2.bf16.msra.mxu0 %v596
    %646 = vmatprep.subr.bf16.mxu0 0
    %647 = vmatpush2.bf16.msra.mxu0 %v595
    %648 = vmatprep.subr.bf16.mxu0 0
    %649 = vmatpush2.bf16.msra.mxu0 %v594
    %650 = vmatprep.mubr.bf16.mxu0 %v482
    %651 = vmatmul.mubr.bf16.gmra.mxu0 %v480
    %v652 = vpop.f32.mrf.mxu0
    %v653 = vadd.f32 %v520, %v652
    %v654 = vpop.f32.mrf.mxu0
    %v655 = vpop.f32.mrf.mxu0
    %v656 = vpop.f32.mrf.mxu0
    %657 = vdwg.mxu0
    %v658 = vpack.c.bf16 %v653, %v653
    %v659 = vxor.u32 %v658, 2147516416
    %v661 = vmul.bf16 %v659, 1069105081
    %v662 = vpow.bf16.pop %v661
    %v663 = vadd.bf16 %v662, 1065369472
    %v664 = vrcp.bf16.pop %v663
    %v665 = vmul.bf16 1065369472, %v664
    %v666 = vld [vmem:[#allocation10] sm:$0xf]
    %v667 = vld [vmem:[#allocation10 + $0x4] sm:$0xf]
    %v668 = vld [vmem:[#allocation10 + $0x8] sm:$0xf]
    %v669 = vld [vmem:[#allocation10 + $0xc] sm:$0xf]
    %v670 = vld [vmem:[#allocation10 + $0x10] sm:$0xf]
    %v671 = vld [vmem:[#allocation10 + $0x14] sm:$0xf]
    %v672 = vld [vmem:[#allocation10 + $0x18] sm:$0xf]
    %v673 = vld [vmem:[#allocation10 + $0x1c] sm:$0xf]
    %v674 = vld [vmem:[#allocation10 + $0x20] sm:$0xf]
    %v675 = vld [vmem:[#allocation10 + $0x24] sm:$0xf]
    %v676 = vld [vmem:[#allocation10 + $0x28] sm:$0xf]
    %v677 = vld [vmem:[#allocation10 + $0x2c] sm:$0xf]
    %v678 = vld [vmem:[#allocation10 + $0x30] sm:$0xf]
    %v679 = vld [vmem:[#allocation10 + $0x34] sm:$0xf]
    %v680 = vld [vmem:[#allocation10 + $0x38] sm:$0xf]
    %v681 = vld [vmem:[#allocation10 + $0x3c] sm:$0xf]
    %v682 = vld [vmem:[%s8] sm:$0x1]
    %v684 = vlaneseq
    %v685 = vshrl.u32 %v684, 7
    %v686 = vsub.s32 0, %v685
    %v687 = vrot.slane %v682, %v686
    %v705 = vunpack.c.l.b16 %v666
    %v706 = vunpack.c.l.b16 %v667
    %v707 = vunpack.c.l.b16 %v668
    %v708 = vunpack.c.l.b16 %v669
    %v709 = vunpack.c.l.b16 %v670
    %v710 = vunpack.c.l.b16 %v671
    %v711 = vunpack.c.l.b16 %v672
    %v712 = vunpack.c.l.b16 %v673
    %v713 = vunpack.c.l.b16 %v674
    %v714 = vunpack.c.l.b16 %v675
    %v715 = vunpack.c.l.b16 %v676
    %v716 = vunpack.c.l.b16 %v677
    %v717 = vunpack.c.l.b16 %v678
    %v718 = vunpack.c.l.b16 %v679
    %v719 = vunpack.c.l.b16 %v680
    %v720 = vunpack.c.l.b16 %v681
    %v721 = vpack.c.b16 %v706, %v705
    %v722 = vpack.c.b16 %v708, %v707
    %v723 = vpack.c.b16 %v710, %v709
    %v724 = vpack.c.b16 %v712, %v711
    %v725 = vpack.c.b16 %v714, %v713
    %v726 = vpack.c.b16 %v716, %v715
    %v727 = vpack.c.b16 %v718, %v717
    %v728 = vpack.c.b16 %v720, %v719
    %737 = vmatprep.subr.bf16.mxu0 0
    %738 = vmatpush1.bf16.msra.mxu0 %v728
    %739 = vmatprep.subr.bf16.mxu0 0
    %740 = vmatpush1.bf16.msra.mxu0 %v727
    %741 = vmatprep.subr.bf16.mxu0 0
    %742 = vmatpush1.bf16.msra.mxu0 %v726
    %743 = vmatprep.subr.bf16.mxu0 0
    %744 = vmatpush1.bf16.msra.mxu0 %v725
    %745 = vmatprep.subr.bf16.mxu0 0
    %746 = vmatpush1.bf16.msra.mxu0 %v724
    %747 = vmatprep.subr.bf16.mxu0 0
    %748 = vmatpush1.bf16.msra.mxu0 %v723
    %749 = vmatprep.subr.bf16.mxu0 0
    %750 = vmatpush1.bf16.msra.mxu0 %v722
    %751 = vmatprep.subr.bf16.mxu0 0
    %752 = vmatpush1.bf16.msra.mxu0 %v721
    %753 = vmatprep.subr.bf16.mxu0 0
    %754 = vmatpush2.bf16.msra.mxu0 0
    %755 = vmatprep.subr.bf16.mxu0 0
    %756 = vmatpush2.bf16.msra.mxu0 0
    %757 = vmatprep.subr.bf16.mxu0 0
    %758 = vmatpush2.bf16.msra.mxu0 0
    %759 = vmatprep.subr.bf16.mxu0 0
    %760 = vmatpush2.bf16.msra.mxu0 0
    %761 = vmatprep.subr.bf16.mxu0 0
    %762 = vmatpush2.bf16.msra.mxu0 0
    %763 = vmatprep.subr.bf16.mxu0 0
    %764 = vmatpush2.bf16.msra.mxu0 0
    %765 = vmatprep.subr.bf16.mxu0 0
    %766 = vmatpush2.bf16.msra.mxu0 0
    %767 = vmatprep.subr.bf16.mxu0 0
    %768 = vmatpush2.bf16.msra.mxu0 0
    %769 = vmatprep.mubr.bf16.mxu0 0
    %770 = vmatmul.mubr.bf16.gmra.mxu0 %v665
    %v771 = vpop.f32.mrf.mxu0
    %v772 = vadd.f32 %v687, %v771
    %v773 = vpop.f32.mrf.mxu0
    %v774 = vpop.f32.mrf.mxu0
    %v775 = vpop.f32.mrf.mxu0
    %776 = vdwg.mxu0
    %v777 = vpack.c.bf16 %v772, %v772
    %v778 = vxor.u32 %v777, 2147516416
    %v780 = vmul.bf16 %v778, 1069105081
    %v781 = vpow.bf16.pop %v780
    %v782 = vadd.bf16 %v781, 1065369472
    %v783 = vrcp.bf16.pop %v782
    %v784 = vmul.bf16 1065369472, %v783
    %v785 = vld [vmem:[#allocation11] sm:$0xf]
    %v786 = vld [vmem:[#allocation11 + $0x4] sm:$0xf]
    %v787 = vld [vmem:[#allocation11 + $0x8] sm:$0xf]
    %v788 = vld [vmem:[#allocation11 + $0xc] sm:$0xf]
    %v789 = vld [vmem:[#allocation11 + $0x10] sm:$0xf]
    %v790 = vld [vmem:[#allocation11 + $0x14] sm:$0xf]
    %v791 = vld [vmem:[#allocation11 + $0x18] sm:$0xf]
    %v792 = vld [vmem:[#allocation11 + $0x1c] sm:$0xf]
    %v793 = vld [vmem:[#allocation11 + $0x20] sm:$0xf]
    %v794 = vld [vmem:[#allocation11 + $0x24] sm:$0xf]
    %v795 = vld [vmem:[#allocation11 + $0x28] sm:$0xf]
    %v796 = vld [vmem:[#allocation11 + $0x2c] sm:$0xf]
    %v797 = vld [vmem:[#allocation11 + $0x30] sm:$0xf]
    %v798 = vld [vmem:[#allocation11 + $0x34] sm:$0xf]
    %v799 = vld [vmem:[#allocation11 + $0x38] sm:$0xf]
    %v800 = vld [vmem:[#allocation11 + $0x3c] sm:$0xf]
    %v801 = vld [vmem:[#allocation13] sm:$0xf]
    %v802 = vld [vmem:[#allocation13 + $0x4] sm:$0xf]
    %v803 = vld [vmem:[#allocation13 + $0x8] sm:$0xf]
    %v804 = vld [vmem:[#allocation13 + $0xc] sm:$0xf]
    %v805 = vld [vmem:[#allocation13 + $0x10] sm:$0xf]
    %v806 = vld [vmem:[#allocation13 + $0x14] sm:$0xf]
    %v807 = vld [vmem:[#allocation13 + $0x18] sm:$0xf]
    %v808 = vld [vmem:[#allocation13 + $0x1c] sm:$0xf]
    %v809 = vld [vmem:[#allocation13 + $0x20] sm:$0xf]
    %v810 = vld [vmem:[#allocation13 + $0x24] sm:$0xf]
    %v811 = vld [vmem:[#allocation13 + $0x28] sm:$0xf]
    %v812 = vld [vmem:[#allocation13 + $0x2c] sm:$0xf]
    %v813 = vld [vmem:[#allocation13 + $0x30] sm:$0xf]
    %v814 = vld [vmem:[#allocation13 + $0x34] sm:$0xf]
    %v815 = vld [vmem:[#allocation13 + $0x38] sm:$0xf]
    %v816 = vld [vmem:[#allocation13 + $0x3c] sm:$0xf]
    %v833 = vunpack.c.l.b16 %v801
    %v834 = vunpack.c.l.b16 %v802
    %v835 = vunpack.c.l.b16 %v803
    %v836 = vunpack.c.l.b16 %v804
    %v837 = vunpack.c.l.b16 %v805
    %v838 = vunpack.c.l.b16 %v806
    %v839 = vunpack.c.l.b16 %v807
    %v840 = vunpack.c.l.b16 %v808
    %v841 = vunpack.c.l.b16 %v809
    %v842 = vunpack.c.l.b16 %v810
    %v843 = vunpack.c.l.b16 %v811
    %v844 = vunpack.c.l.b16 %v812
    %v845 = vunpack.c.l.b16 %v813
    %v846 = vunpack.c.l.b16 %v814
    %v847 = vunpack.c.l.b16 %v815
    %v848 = vunpack.c.l.b16 %v816
    %v849 = vpack.c.b16 %v834, %v833
    %v850 = vpack.c.b16 %v836, %v835
    %v851 = vpack.c.b16 %v838, %v837
    %v852 = vpack.c.b16 %v840, %v839
    %v853 = vpack.c.b16 %v842, %v841
    %v854 = vpack.c.b16 %v844, %v843
    %v855 = vpack.c.b16 %v846, %v845
    %v856 = vpack.c.b16 %v848, %v847
    %865 = vmatprep.subr.bf16.mxu0 0
    %866 = vmatpush1.bf16.msra.mxu0 %v856
    %867 = vmatprep.subr.bf16.mxu0 0
    %868 = vmatpush1.bf16.msra.mxu0 %v855
    %869 = vmatprep.subr.bf16.mxu0 0
    %870 = vmatpush1.bf16.msra.mxu0 %v854
    %871 = vmatprep.subr.bf16.mxu0 0
    %872 = vmatpush1.bf16.msra.mxu0 %v853
    %873 = vmatprep.subr.bf16.mxu0 0
    %874 = vmatpush1.bf16.msra.mxu0 %v852
    %875 = vmatprep.subr.bf16.mxu0 0
    %876 = vmatpush1.bf16.msra.mxu0 %v851
    %877 = vmatprep.subr.bf16.mxu0 0
    %878 = vmatpush1.bf16.msra.mxu0 %v850
    %879 = vmatprep.subr.bf16.mxu0 0
    %880 = vmatpush1.bf16.msra.mxu0 %v849
    %881 = vmatprep.subr.bf16.mxu0 0
    %882 = vmatpush2.bf16.msra.mxu0 0
    %883 = vmatprep.subr.bf16.mxu0 0
    %884 = vmatpush2.bf16.msra.mxu0 0
    %885 = vmatprep.subr.bf16.mxu0 0
    %886 = vmatpush2.bf16.msra.mxu0 0
    %887 = vmatprep.subr.bf16.mxu0 0
    %888 = vmatpush2.bf16.msra.mxu0 0
    %889 = vmatprep.subr.bf16.mxu0 0
    %890 = vmatpush2.bf16.msra.mxu0 0
    %891 = vmatprep.subr.bf16.mxu0 0
    %892 = vmatpush2.bf16.msra.mxu0 0
    %893 = vmatprep.subr.bf16.mxu0 0
    %894 = vmatpush2.bf16.msra.mxu0 0
    %895 = vmatprep.subr.bf16.mxu0 0
    %896 = vmatpush2.bf16.msra.mxu0 0
    %897 = vmatprep.mubr.bf16.mxu0 0
    %898 = vmatmul.mubr.bf16.gmra.mxu0 %v665
    %v899 = vpop.f32.mrf.mxu0
    %v900 = vadd.f32 0.0, %v899
    %v901 = vpop.f32.mrf.mxu0
    %v902 = vpop.f32.mrf.mxu0
    %v903 = vpop.f32.mrf.mxu0
    %904 = vdwg.mxu0
    %v921 = vunpack.c.l.b16 %v785
    %v922 = vunpack.c.l.b16 %v786
    %v923 = vunpack.c.l.b16 %v787
    %v924 = vunpack.c.l.b16 %v788
    %v925 = vunpack.c.l.b16 %v789
    %v926 = vunpack.c.l.b16 %v790
    %v927 = vunpack.c.l.b16 %v791
    %v928 = vunpack.c.l.b16 %v792
    %v929 = vunpack.c.l.b16 %v793
    %v930 = vunpack.c.l.b16 %v794
    %v931 = vunpack.c.l.b16 %v795
    %v932 = vunpack.c.l.b16 %v796
    %v933 = vunpack.c.l.b16 %v797
    %v934 = vunpack.c.l.b16 %v798
    %v935 = vunpack.c.l.b16 %v799
    %v936 = vunpack.c.l.b16 %v800
    %v937 = vpack.c.b16 %v922, %v921
    %v938 = vpack.c.b16 %v924, %v923
    %v939 = vpack.c.b16 %v926, %v925
    %v940 = vpack.c.b16 %v928, %v927
    %v941 = vpack.c.b16 %v930, %v929
    %v942 = vpack.c.b16 %v932, %v931
    %v943 = vpack.c.b16 %v934, %v933
    %v944 = vpack.c.b16 %v936, %v935
    %953 = vmatprep.subr.bf16.mxu0 0
    %954 = vmatpush1.bf16.msra.mxu0 %v944
    %955 = vmatprep.subr.bf16.mxu0 0
    %956 = vmatpush1.bf16.msra.mxu0 %v943
    %957 = vmatprep.subr.bf16.mxu0 0
    %958 = vmatpush1.bf16.msra.mxu0 %v942
    %959 = vmatprep.subr.bf16.mxu0 0
    %960 = vmatpush1.bf16.msra.mxu0 %v941
    %961 = vmatprep.subr.bf16.mxu0 0
    %962 = vmatpush1.bf16.msra.mxu0 %v940
    %963 = vmatprep.subr.bf16.mxu0 0
    %964 = vmatpush1.bf16.msra.mxu0 %v939
    %965 = vmatprep.subr.bf16.mxu0 0
    %966 = vmatpush1.bf16.msra.mxu0 %v938
    %967 = vmatprep.subr.bf16.mxu0 0
    %968 = vmatpush1.bf16.msra.mxu0 %v937
    %969 = vmatprep.subr.bf16.mxu0 0
    %970 = vmatpush2.bf16.msra.mxu0 0
    %971 = vmatprep.subr.bf16.mxu0 0
    %972 = vmatpush2.bf16.msra.mxu0 0
    %973 = vmatprep.subr.bf16.mxu0 0
    %974 = vmatpush2.bf16.msra.mxu0 0
    %975 = vmatprep.subr.bf16.mxu0 0
    %976 = vmatpush2.bf16.msra.mxu0 0
    %977 = vmatprep.subr.bf16.mxu0 0
    %978 = vmatpush2.bf16.msra.mxu0 0
    %979 = vmatprep.subr.bf16.mxu0 0
    %980 = vmatpush2.bf16.msra.mxu0 0
    %981 = vmatprep.subr.bf16.mxu0 0
    %982 = vmatpush2.bf16.msra.mxu0 0
    %983 = vmatprep.subr.bf16.mxu0 0
    %984 = vmatpush2.bf16.msra.mxu0 0
    %985 = vmatprep.mubr.bf16.mxu0 0
    %986 = vmatmul.mubr.bf16.gmra.mxu0 %v784
    %v987 = vpop.f32.mrf.mxu0
    %v988 = vadd.f32 %v900, %v987
    %v989 = vpop.f32.mrf.mxu0
    %v990 = vpop.f32.mrf.mxu0
    %v991 = vpop.f32.mrf.mxu0
    %992 = vdwg.mxu0
    %v993 = vld [vmem:[%s11] sm:$0x1]
    %v995 = vlaneseq
    %v996 = vshrl.u32 %v995, 7
    %v997 = vsub.s32 0, %v996
    %v998 = vrot.slane %v993, %v997
    %v1000 = vadd.f32 %v988, %v998
    %v1001 = vlaneseq
    %v1002 = vand.u32 %v1001, 127
    %vm1003 = vcmp.lt.s32.totalorder %v1002, 8
    %v1004 = vsel %vm1003, %v1000, -inf
    %1005 = vmax.xlane.f32.xlu0 %v1004
    %v1006 = vpop.xlane.xlu0 %1005
    %v1007 = vsub.f32 %v1000, %v1006
    %v1008 = vsel %vm1003, %v1007, -inf
    %v1009 = vpack.c.bf16 %v1008, %v1008
    %v1011 = vmul.bf16 %v1009, 1069105081
    %v1012 = vpow.bf16.pop %v1011
    %v1013 = vunpack.c.l.bf16 %v1012
    %1014 = vadd.xlane.f32.xlu0 %v1013
    %v1015 = vpop.xlane.xlu0 %1014
    %v1016 = vrcp.pop %v1015
    %v1017 = vmul.f32 1.0, %v1016
    %v1018 = vmul.f32 %v1013, %v1017
    %v1019 = vpack.c.bf16 %v1000, %v1000
    %v1020 = vxor.u32 %v1019, 2147516416
    %v1022 = vmul.bf16 %v1020, 1069105081
    %v1023 = vpow.bf16.pop %v1022
    %v1024 = vadd.bf16 %v1023, 1065369472
    %v1025 = vrcp.bf16.pop %v1024
    %v1026 = vmul.bf16 1065369472, %v1025
    %v1027 = vunpack.c.l.bf16 %v1026
    %v1028 = vmul.f32 %v1027, 5.0
    %v1029 = vadd.f32 %v1028, 1.0
    %vm1030 = vcmp.eq.s32.totalorder %v1002, 8
    %v1031 = vsel %vm1030, %v1029, 0.0
    %v1032 = vsel %vm1003, %v1018, %v1031
    %v1033 = vpack.c.bf16 %v1032, %v1032
    %1034 = vst [vmem:[#allocation14] sm:$0xf] %v1033
    // Predicated region
    $region78: #{tpu_custom_call.1} parent=1 // pred_check
      _
    $region79: #{tpu_custom_call.1} parent=1 // pred_check_branch
      %1036 = sbr.rel (0) target = $region81
    $region80: #{tpu_custom_call.1} parent=1 // pred_region
      %s1038 = ssub.s32 64, 64
      %1039 = vsyncadd [#allocation4], %s1038
      %s1041 = sshll.u32 [#allocation14], 4
      %s1042 = int_to_ptr.vmem [resolvable:$true] %s1041
      %1044 = dma.vmem_to_hbm [thread:$0]  %s1042, 64, %s12, [#allocation4]
    $region81: #{tpu_custom_call.1} parent=1 // pred_fallthru
      _
    // Predicated region
    $region82: #{tpu_custom_call.1} parent=1 // pred_check
      _
    $region83: #{tpu_custom_call.1} parent=1 // pred_check_branch
      %1046 = sbr.rel (0) target = $region85
    $region84: #{tpu_custom_call.1} parent=1 // pred_region
      %1047 = dma.done [#allocation4], 64
    $region85: #{tpu_custom_call.1} parent=1 // pred_fallthru
      _
    %1048 = vsyncpa [#allocation3], 1
    %1049 = vsyncpa [#allocation6], 1
    %1050 = vsyncpa [#allocation9], 1
    %1051 = vsyncpa [#allocation12], 1
    %1052 = vsyncpa [#allocation4], 1

</llo_original>
